<compile_context>
chip_gen: v7x
topology: tpu7x:2x2x1
jax: 0.10.0
libtpu: 0.0.40
codegen_flags: <defaults>
</compile_context>

<pallas_src>
import jax
import jax.numpy as jnp
from jax import lax
from jax.experimental import pallas as pl
from jax.experimental.pallas import tpu as pltpu

IN_FEATURES = 128
HIDDEN = 64
NUM_CLASSES = 2


def _round_up(n, m):
    return ((n + m - 1) // m) * m


def _cdiv(a, b):
    return (a + b - 1) // b


def _tile_config():
    """Per-generation (max_tile_b, vmem_limit_bytes) for the batch tiling."""
    try:
        kind = jax.devices()[0].device_kind.lower()
    except Exception:
        kind = ""
    if "v6" in kind:                       # 128 MiB VMEM, 1.4 TB/s HBM
        return 16384, 96 * 1024 * 1024
    if "v7" in kind or "7x" in kind:       # 64 MiB VMEM/TC, 3.2 TB/s, 2 TCs
        return 8192, 48 * 1024 * 1024
    if "v5e" in kind or "v5 lite" in kind or "v5lite" in kind:
        return 8192, 48 * 1024 * 1024      # 128 MiB physical, 16 MiB default scoped
    return 4096, None                      # unknown chip: conservative defaults


def mlp_softmax_kernel(x_ref, w1_ref, b1_ref, wd_ref, bd_ref, o_ref):
    # fc1 + ReLU on the MXU; f32 accumulation regardless of input dtype.
    h = jnp.dot(x_ref[...], w1_ref[...], preferred_element_type=jnp.float32)
    h = jnp.maximum(h + b1_ref[...], 0.0)                        # (tile_b, 64)

    # 2-class softmax shortcut: with d = logit1 - logit0,
    #   p0 = sigmoid(-d), p1 = sigmoid(+d)  (exactly the softmax columns).
    # d = h @ (w2[:,1]-w2[:,0]) + (b2[1]-b2[0]) as a broadcast multiply +
    # lane reduce (XLU slot; MXU/XLU have slack under the HBM roofline).
    d = jnp.sum(h * wd_ref[...], axis=1, keepdims=True) + bd_ref[...]  # (tile_b, 1)

    # Evaluate both classes at once -> one merged (tile_b, 2) store per
    # 8-row group instead of two 1-lane column stores.
    lane = lax.broadcasted_iota(jnp.int32, (1, NUM_CLASSES), 1)    # [[0, 1]]
    sign = jnp.where(lane == 0, -1.0, 1.0)                         # [[-1, 1]]
    o_ref[...] = (1.0 / (1.0 + jnp.exp(-d * sign))).astype(o_ref.dtype)


def combined_classifier_forward(x, w1, b1, w2, b2, *, max_tile_b=None,
                                vmem_limit_bytes=None):
    """Forward pass of CombinedClassifier.

    x: (B, 128); w1: (128, 64); b1: (64,); w2: (64, 2); b2: (2,).
    x and w1 are consumed in their incoming dtype (pass bf16 to halve the
    dominant HBM traffic of this bandwidth-bound kernel); output is f32.
    """
    B, F = x.shape
    assert F == IN_FEATURES and w1.shape == (IN_FEATURES, HIDDEN)
    assert w2.shape == (HIDDEN, NUM_CLASSES) and b2.shape == (NUM_CLASSES,)

    cfg_tile, cfg_vmem = _tile_config()
    if max_tile_b is None:
        max_tile_b = cfg_tile
    if vmem_limit_bytes is None:
        vmem_limit_bytes = cfg_vmem

    # Tiny 2-class logit-difference weights, precomputed in f32.
    wd = (w2[:, 1] - w2[:, 0]).reshape(1, HIDDEN).astype(jnp.float32)
    bd = (b2[1] - b2[0]).reshape(1, 1).astype(jnp.float32)
    b1_2d = b1.reshape(1, HIDDEN).astype(jnp.float32)

    # Balanced batch tiling: choose num_tiles first, then tile_b, so padding
    # waste is < 8 rows per tile.  >= 2 tiles once B > 512 so the "parallel"
    # grid axis can split across v7x's two TensorCores (and gives DMA/compute
    # overlap on single-TC chips as well).
    num_tiles = max(_cdiv(B, max_tile_b), 2 if B > 512 else 1)
    tile_b = _round_up(_cdiv(B, num_tiles), 8)
    padded_b = tile_b * num_tiles
    if padded_b != B:
        x = jnp.pad(x, ((0, padded_b - B), (0, 0)))

    cost = pl.CostEstimate(
        flops=2 * padded_b * F * HIDDEN + 6 * padded_b * HIDDEN,
        transcendentals=padded_b * NUM_CLASSES,
        bytes_accessed=(padded_b * F * x.dtype.itemsize
                        + F * HIDDEN * w1.dtype.itemsize
                        + (2 * HIDDEN + 1) * 4
                        + padded_b * NUM_CLASSES * 4),
    )

    const = pl.Buffered(1)   # weights/biases never change across grid steps
    out = pl.pallas_call(
        mlp_softmax_kernel,
        out_shape=jax.ShapeDtypeStruct((padded_b, NUM_CLASSES), jnp.float32),
        grid=(num_tiles,),
        in_specs=[
            pl.BlockSpec((tile_b, F), lambda i: (i, 0)),                       # x (pipelined)
            pl.BlockSpec((F, HIDDEN), lambda i: (0, 0), pipeline_mode=const),  # w1 (resident)
            pl.BlockSpec((1, HIDDEN), lambda i: (0, 0), pipeline_mode=const),  # b1
            pl.BlockSpec((1, HIDDEN), lambda i: (0, 0), pipeline_mode=const),  # w2 diff col
            pl.BlockSpec((1, 1), lambda i: (0, 0), pipeline_mode=const),       # b2 diff
        ],
        out_specs=pl.BlockSpec((tile_b, NUM_CLASSES), lambda i: (i, 0)),
        compiler_params=pltpu.CompilerParams(
            dimension_semantics=("parallel",),
            vmem_limit_bytes=vmem_limit_bytes,
        ),
        cost_estimate=cost,
    )(x, w1, b1_2d, wd, bd)

    return out[:B]


def init_params(key):
    """Deterministic init mirroring nn.Linear shapes: fc1 (64,128), fc2 (2,64)."""
    k1, k2, k3, k4 = jax.random.split(key, 4)
    # PyTorch stores weight as (out, in); create that then transpose to (in, out).
    w1_pt = jax.random.normal(k1, (HIDDEN, IN_FEATURES), jnp.float32) * 0.05
    b1 = jax.random.normal(k2, (HIDDEN,), jnp.float32) * 0.05
    w2_pt = jax.random.normal(k3, (NUM_CLASSES, HIDDEN), jnp.float32) * 0.05
    b2 = jax.random.normal(k4, (NUM_CLASSES,), jnp.float32) * 0.05
    return w1_pt.T, b1, w2_pt.T, b2


def _reference(x, w1, b1, w2, b2):
    h = jnp.maximum(x @ w1 + b1, 0.0)
    logits = h @ w2 + b2
    return jax.nn.softmax(logits, axis=1)


if __name__ == "__main__":
    key = jax.random.PRNGKey(0)
    kx, kp, kx2, kx3 = jax.random.split(key, 4)
    w1, b1, w2, b2 = init_params(kp)

    # Small batch (harness-sized).
    B = 8
    x = jax.random.normal(kx, (B, IN_FEATURES), jnp.float32)
    out = jax.block_until_ready(combined_classifier_forward(x, w1, b1, w2, b2))
    ref = _reference(x, w1, b1, w2, b2)
    assert out.shape == (B, NUM_CLASSES)
    assert jnp.allclose(out, ref, atol=1e-5), "mismatch vs reference (B=8)"
    assert jnp.allclose(jnp.sum(out, axis=1), 1.0, atol=1e-5)

    # Non-tile-divisible batch exercises the padding path.
    B2 = 50
    x2 = jax.random.normal(kx2, (B2, IN_FEATURES), jnp.float32)
    out2 = jax.block_until_ready(combined_classifier_forward(x2, w1, b1, w2, b2))
    ref2 = _reference(x2, w1, b1, w2, b2)
    assert out2.shape == (B2, NUM_CLASSES)
    assert jnp.allclose(out2, ref2, atol=1e-5), "mismatch vs reference (B=50)"

    # Mid-size batch exercises the multi-tile grid ("parallel" axis, padding,
    # single-buffered constants under a pipelined x stream).
    B3 = 600
    x3 = jax.random.normal(kx3, (B3, IN_FEATURES), jnp.float32)
    out3 = jax.block_until_ready(combined_classifier_forward(x3, w1, b1, w2, b2))
    ref3 = _reference(x3, w1, b1, w2, b2)
    assert out3.shape == (B3, NUM_CLASSES)
    assert jnp.allclose(out3, ref3, atol=1e-5), "mismatch vs reference (B=600)"

    # Opt-in bf16 fast path (halves HBM traffic; looser tolerance).
    out_bf16 = jax.block_until_ready(
        combined_classifier_forward(
            x.astype(jnp.bfloat16), w1.astype(jnp.bfloat16), b1, w2, b2))
    assert jnp.allclose(out_bf16, ref, atol=2e-2), "mismatch vs reference (bf16)"

    print("KERNEL_OK")
</pallas_src>

<mosaic_0001>
module attributes {stable_mosaic.version = 11 : i64} {
  func.func @mlp_softmax_kernel(%arg0: i32, %arg1: memref<8x128xf32, #tpu.memory_space<vmem>>, %arg2: memref<128x64xf32, #tpu.memory_space<vmem>>, %arg3: memref<1x64xf32, #tpu.memory_space<vmem>>, %arg4: memref<1x64xf32, #tpu.memory_space<vmem>>, %arg5: memref<1x1xf32, #tpu.memory_space<vmem>>, %arg6: memref<8x2xf32, #tpu.memory_space<vmem>>) attributes {dimension_semantics = [#tpu.dimension_semantics<parallel>], iteration_bounds = array<i64: 1>, scalar_prefetch = 0 : i64, scratch_operands = 0 : i64, tpu.core_type = #tpu.core_type<tc>, window_params = [{transform_indices = @transform_0, window_bounds = array<i64: 8, 128>}, {pipeline_mode = #tpu.pipeline_mode<synchronous>, transform_indices = @transform_1, window_bounds = array<i64: 128, 64>}, {pipeline_mode = #tpu.pipeline_mode<synchronous>, transform_indices = @transform_2, window_bounds = array<i64: 1, 64>}, {pipeline_mode = #tpu.pipeline_mode<synchronous>, transform_indices = @transform_3, window_bounds = array<i64: 1, 64>}, {pipeline_mode = #tpu.pipeline_mode<synchronous>, transform_indices = @transform_4, window_bounds = array<i64: 1, 1>}, {transform_indices = @transform_5, window_bounds = array<i64: 8, 2>}]} {
    %c0 = arith.constant 0 : index
    %c0_0 = arith.constant 0 : index
    %0 = vector.load %arg1[%c0, %c0_0] : memref<8x128xf32, #tpu.memory_space<vmem>>, vector<8x128xf32>
    %c0_1 = arith.constant 0 : index
    %c0_2 = arith.constant 0 : index
    %1 = vector.load %arg2[%c0_1, %c0_2] : memref<128x64xf32, #tpu.memory_space<vmem>>, vector<128x64xf32>
    %cst = arith.constant dense<0.000000e+00> : vector<8x64xf32>
    %2 = tpu.matmul %0, %1, %cst {dimension_numbers = #tpu.dot_dimension_numbers<[1], [0], [0], [1], [0, 0, 1, 1], [], []>} : vector<8x128xf32>, vector<128x64xf32>, vector<8x64xf32> -> vector<8x64xf32>
    %c0_3 = arith.constant 0 : index
    %c0_4 = arith.constant 0 : index
    %3 = vector.load %arg3[%c0_3, %c0_4] : memref<1x64xf32, #tpu.memory_space<vmem>>, vector<1x64xf32>
    %4 = vector.broadcast %3 : vector<1x64xf32> to vector<8x64xf32>
    %5 = arith.addf %2, %4 : vector<8x64xf32>
    %cst_5 = arith.constant 0.000000e+00 : f32
    %6 = vector.broadcast %cst_5 : f32 to vector<8x64xf32>
    %7 = arith.maximumf %5, %6 : vector<8x64xf32>
    %c0_6 = arith.constant 0 : index
    %c0_7 = arith.constant 0 : index
    %8 = vector.load %arg4[%c0_6, %c0_7] : memref<1x64xf32, #tpu.memory_space<vmem>>, vector<1x64xf32>
    %9 = vector.broadcast %8 : vector<1x64xf32> to vector<8x64xf32>
    %10 = arith.mulf %7, %9 : vector<8x64xf32>
    %cst_8 = arith.constant dense<0.000000e+00> : vector<8xf32>
    %11 = vector.multi_reduction <add>, %10, %cst_8 [1] : vector<8x64xf32> to vector<8xf32>
    %12 = vector.shape_cast %11 : vector<8xf32> to vector<8x1xf32>
    %c0_9 = arith.constant 0 : index
    %c0_10 = arith.constant 0 : index
    %13 = vector.load %arg5[%c0_9, %c0_10] : memref<1x1xf32, #tpu.memory_space<vmem>>, vector<1x1xf32>
    %14 = vector.broadcast %13 : vector<1x1xf32> to vector<8x1xf32>
    %15 = arith.addf %12, %14 : vector<8x1xf32>
    %16 = tpu.iota {dimensions = array<i32: 1>} : vector<1x2xi32>
    %c0_i32 = arith.constant 0 : i32
    %17 = vector.broadcast %c0_i32 : i32 to vector<1x2xi32>
    %18 = arith.cmpi eq, %16, %17 : vector<1x2xi32>
    %cst_11 = arith.constant -1.000000e+00 : f32
    %cst_12 = arith.constant 1.000000e+00 : f32
    %19 = vector.broadcast %cst_11 : f32 to vector<1x2xf32>
    %20 = vector.broadcast %cst_12 : f32 to vector<1x2xf32>
    %21 = arith.select %18, %19, %20 : vector<1x2xi1>, vector<1x2xf32>
    %cst_13 = arith.constant 0.000000e+00 : f32
    %22 = vector.broadcast %cst_13 : f32 to vector<8x1xf32>
    %23 = arith.subf %22, %15 : vector<8x1xf32>
    %24 = vector.broadcast %23 : vector<8x1xf32> to vector<8x2xf32>
    %25 = vector.broadcast %21 : vector<1x2xf32> to vector<8x2xf32>
    %26 = arith.mulf %24, %25 : vector<8x2xf32>
    %27 = math.exp %26 : vector<8x2xf32>
    %cst_14 = arith.constant 1.000000e+00 : f32
    %28 = vector.broadcast %cst_14 : f32 to vector<8x2xf32>
    %29 = arith.addf %28, %27 : vector<8x2xf32>
    %cst_15 = arith.constant 1.000000e+00 : f32
    %30 = vector.broadcast %cst_15 : f32 to vector<8x2xf32>
    %31 = arith.divf %30, %29 : vector<8x2xf32>
    %c0_16 = arith.constant 0 : index
    %c0_17 = arith.constant 0 : index
    %32 = vector.load %arg6[%c0_16, %c0_17] : memref<8x2xf32, #tpu.memory_space<vmem>>, vector<8x2xf32>
    tpu.vector_store %arg6[%c0_16, %c0_17], %31 {strides = array<i32>} : memref<8x2xf32, #tpu.memory_space<vmem>>, vector<8x2xf32>,
    return
  }
  func.func @transform_0(%arg0: i32) -> (i32, i32) {
    %c0_i32 = arith.constant 0 : i32
    %c0_i32_0 = arith.constant 0 : i32
    return %arg0, %c0_i32 : i32, i32
  }
  func.func @transform_1(%arg0: i32) -> (i32, i32) {
    %c0_i32 = arith.constant 0 : i32
    %c0_i32_0 = arith.constant 0 : i32
    %c0_i32_1 = arith.constant 0 : i32
    return %c0_i32, %c0_i32_0 : i32, i32
  }
  func.func @transform_2(%arg0: i32) -> (i32, i32) {
    %c0_i32 = arith.constant 0 : i32
    %c0_i32_0 = arith.constant 0 : i32
    %c0_i32_1 = arith.constant 0 : i32
    return %c0_i32, %c0_i32_0 : i32, i32
  }
  func.func @transform_3(%arg0: i32) -> (i32, i32) {
    %c0_i32 = arith.constant 0 : i32
    %c0_i32_0 = arith.constant 0 : i32
    %c0_i32_1 = arith.constant 0 : i32
    return %c0_i32, %c0_i32_0 : i32, i32
  }
  func.func @transform_4(%arg0: i32) -> (i32, i32) {
    %c0_i32 = arith.constant 0 : i32
    %c0_i32_0 = arith.constant 0 : i32
    %c0_i32_1 = arith.constant 0 : i32
    return %c0_i32, %c0_i32_0 : i32, i32
  }
  func.func @transform_5(%arg0: i32) -> (i32, i32) {
    %c0_i32 = arith.constant 0 : i32
    %c0_i32_0 = arith.constant 0 : i32
    return %arg0, %c0_i32 : i32, i32
  }
}

</mosaic_0001>

<llo_original>
// kernel: tpu_custom_call.1
$region0: #{tpu_custom_call.1}
  #allocation0 [shape = 'u32[]', space=smem, size = 0x4, offset = 0x4, fixed_abs, tag = 'smem constant byte address 0x4 - core index']
  #allocation1 [shape = 'u32[144,128]{1,0:T(1,128)}', space=vmem, size = 0x12000, scoped, tag = 'internal scratch']
  #allocation2 [shape = 'f32[1,1]{1,0:T(1,128)S(1)}', space=vmem, size = 0x200, scoped, tag = 'scoped memory for tpu_custom_call.1']
  %s0 = inlined_call_operand.vmem [shape: f32[8,128], index: 0, kind: input, shape index: {}]
  %s1 = inlined_call_operand.vmem [shape: f32[128,64], index: 1, kind: input, shape index: {}]
  %s2 = inlined_call_operand.vmem [shape: f32[1,64], index: 2, kind: input, shape index: {}]
  %s3 = inlined_call_operand.vmem [shape: f32[1,64], index: 3, kind: input, shape index: {}]
  %s4 = inlined_call_operand.<no memory space> [shape: f32[1,1], index: 4, kind: input, shape index: {}]
  %s5 = inlined_call_operand.vmem [shape: f32[8,2], index: 5, kind: output, shape index: {}]
  %s6 = sld [smem:[#allocation0]]
  $region30: #{tpu_custom_call.1} parent=0
    _
  %s8 = ssub.s32 1, %s6
  %s9 = scalar_select 0, %s8, %s6
  %v10 = vstv %s4
  %11 = vst [vmem:[#allocation2] sm:$0x1] %v10
  // Predicated region
  $region2: #{tpu_custom_call.1} parent=0 // pred_check
    _
  $region3: #{tpu_custom_call.1} parent=0 // pred_check_branch
    %13 = sbr.rel (0) target = $region5
  $region4: #{tpu_custom_call.1} parent=0 // pred_region
    _
  $region5: #{tpu_custom_call.1} parent=0 // pred_fallthru
    _
  // Predicated region
  $region6: #{tpu_custom_call.1} parent=0 // pred_check
    _
  $region7: #{tpu_custom_call.1} parent=0 // pred_check_branch
    %15 = sbr.rel (0) target = $region9
  $region8: #{tpu_custom_call.1} parent=0 // pred_region
    _
  $region9: #{tpu_custom_call.1} parent=0 // pred_fallthru
    _
  // Predicated region
  $region10: #{tpu_custom_call.1} parent=0 // pred_check
    _
  $region11: #{tpu_custom_call.1} parent=0 // pred_check_branch
    %17 = sbr.rel (0) target = $region13
  $region12: #{tpu_custom_call.1} parent=0 // pred_region
    _
  $region13: #{tpu_custom_call.1} parent=0 // pred_fallthru
    _
  // Predicated region
  $region14: #{tpu_custom_call.1} parent=0 // pred_check
    _
  $region15: #{tpu_custom_call.1} parent=0 // pred_check_branch
    %19 = sbr.rel (0) target = $region17
  $region16: #{tpu_custom_call.1} parent=0 // pred_region
    _
  $region17: #{tpu_custom_call.1} parent=0 // pred_fallthru
    _
  // Predicated region
  $region18: #{tpu_custom_call.1} parent=0 // pred_check
    _
  $region19: #{tpu_custom_call.1} parent=0 // pred_check_branch
    %21 = sbr.rel (0) target = $region21
  $region20: #{tpu_custom_call.1} parent=0 // pred_region
    _
  $region21: #{tpu_custom_call.1} parent=0 // pred_fallthru
    _
  %v22 = vld [vmem:[%s0] sm:$0xff]
  %v23 = vld [vmem:[%s1] sm:$0xff]
  %v24 = vld [vmem:[%s1 + $0x8] sm:$0xff]
  %v25 = vld [vmem:[%s1 + $0x10] sm:$0xff]
  %v26 = vld [vmem:[%s1 + $0x18] sm:$0xff]
  %v27 = vld [vmem:[%s1 + $0x20] sm:$0xff]
  %v28 = vld [vmem:[%s1 + $0x28] sm:$0xff]
  %v29 = vld [vmem:[%s1 + $0x30] sm:$0xff]
  %v30 = vld [vmem:[%s1 + $0x38] sm:$0xff]
  %v31 = vld [vmem:[%s1 + $0x40] sm:$0xff]
  %v32 = vld [vmem:[%s1 + $0x48] sm:$0xff]
  %v33 = vld [vmem:[%s1 + $0x50] sm:$0xff]
  %v34 = vld [vmem:[%s1 + $0x58] sm:$0xff]
  %v35 = vld [vmem:[%s1 + $0x60] sm:$0xff]
  %v36 = vld [vmem:[%s1 + $0x68] sm:$0xff]
  %v37 = vld [vmem:[%s1 + $0x70] sm:$0xff]
  %v38 = vld [vmem:[%s1 + $0x78] sm:$0xff]
  %v39 = vld [vmem:[%s2] sm:$0x1]
  %v41 = vlaneseq
  %v42 = vshrl.u32 %v41, 7
  %v43 = vsub.s32 0, %v42
  %v44 = vrot.slane %v39, %v43
  %46 = vmatprep.subr.mxu0 0.0
  %47 = vmatpush1.msra.mxu0 %v23
  %48 = vmatprep.subr.mxu0 0.0
  %49 = vmatpush1.msra.mxu0 %v24
  %50 = vmatprep.subr.mxu0 0.0
  %51 = vmatpush1.msra.mxu0 %v25
  %52 = vmatprep.subr.mxu0 0.0
  %53 = vmatpush1.msra.mxu0 %v26
  %54 = vmatprep.subr.mxu0 0.0
  %55 = vmatpush1.msra.mxu0 %v27
  %56 = vmatprep.subr.mxu0 0.0
  %57 = vmatpush1.msra.mxu0 %v28
  %58 = vmatprep.subr.mxu0 0.0
  %59 = vmatpush1.msra.mxu0 %v29
  %60 = vmatprep.subr.mxu0 0.0
  %61 = vmatpush1.msra.mxu0 %v30
  %62 = vmatprep.subr.mxu0 0.0
  %63 = vmatpush1.msra.mxu0 %v31
  %64 = vmatprep.subr.mxu0 0.0
  %65 = vmatpush1.msra.mxu0 %v32
  %66 = vmatprep.subr.mxu0 0.0
  %67 = vmatpush1.msra.mxu0 %v33
  %68 = vmatprep.subr.mxu0 0.0
  %69 = vmatpush1.msra.mxu0 %v34
  %70 = vmatprep.subr.mxu0 0.0
  %71 = vmatpush1.msra.mxu0 %v35
  %72 = vmatprep.subr.mxu0 0.0
  %73 = vmatpush1.msra.mxu0 %v36
  %74 = vmatprep.subr.mxu0 0.0
  %75 = vmatpush1.msra.mxu0 %v37
  %76 = vmatprep.subr.mxu0 0.0
  %77 = vmatpush1.msra.mxu0 %v38
  %78 = vmatprep.subr.mxu0 0.0
  %79 = vmatpush1.msra.mxu0 0.0
  %80 = vmatprep.subr.mxu0 0.0
  %81 = vmatpush1.msra.mxu0 0.0
  %82 = vmatprep.subr.mxu0 0.0
  %83 = vmatpush1.msra.mxu0 0.0
  %84 = vmatprep.subr.mxu0 0.0
  %85 = vmatpush1.msra.mxu0 0.0
  %86 = vmatprep.subr.mxu0 0.0
  %87 = vmatpush1.msra.mxu0 0.0
  %88 = vmatprep.subr.mxu0 0.0
  %89 = vmatpush1.msra.mxu0 0.0
  %90 = vmatprep.subr.mxu0 0.0
  %91 = vmatpush1.msra.mxu0 0.0
  %92 = vmatprep.subr.mxu0 0.0
  %93 = vmatpush1.msra.mxu0 0.0
  %94 = vmatprep.subr.mxu0 0.0
  %95 = vmatpush1.msra.mxu0 0.0
  %96 = vmatprep.subr.mxu0 0.0
  %97 = vmatpush1.msra.mxu0 0.0
  %98 = vmatprep.subr.mxu0 0.0
  %99 = vmatpush1.msra.mxu0 0.0
  %100 = vmatprep.subr.mxu0 0.0
  %101 = vmatpush1.msra.mxu0 0.0
  %102 = vmatprep.subr.mxu0 0.0
  %103 = vmatpush1.msra.mxu0 0.0
  %104 = vmatprep.subr.mxu0 0.0
  %105 = vmatpush1.msra.mxu0 0.0
  %106 = vmatprep.subr.mxu0 0.0
  %107 = vmatpush1.msra.mxu0 0.0
  %108 = vmatprep.subr.mxu0 0.0
  %109 = vmatpush1.msra.mxu0 0.0
  %110 = vmatprep.mubr.f32.mxu0 0.0
  %111 = vmatmul.mubr.f32.gmra.mrb[0].mxu0 %v22
  %v112 = vpop.f32.mrb[0].mxu0
  %v113 = vadd.f32 %v44, %v112
  %v114 = vpop.f32.mrb[0].mxu0
  %115 = vdwg.mxu0
  %v116 = vmax.f32 %v113, 0.0
  %v117 = vld [vmem:[%s3] sm:$0x1]
  %v119 = vlaneseq
  %v120 = vshrl.u32 %v119, 7
  %v121 = vsub.s32 0, %v120
  %v122 = vrot.slane %v117, %v121
  %v124 = vmul.f32 %v116, %v122
  %vm125 = vcmask 523264
  %v126 = vsel %vm125, %v124, 0.0
  %127 = vadd.xlane.f32.xlu0 %v126
  %v128 = vpop.xlane.xlu0 %127
  %v129 = vld [vmem:[#allocation2] sm:$0x1]
  %v131 = vlaneseq
  %v132 = vshrl.u32 %v131, 7
  %v133 = vsub.s32 0, %v132
  %v134 = vrot.slane %v129, %v133
  %v136 = vadd.f32 %v128, %v134
  %v137 = vlaneseq
  %v138 = vand.u32 %v137, 127
  %vm139 = vcmp.eq.s32.totalorder %v138, 0
  %v140 = vsel %vm139, -1.0, 1.0
  %v141 = vsub.f32 0.0, %v136
  %143 = vset.pattern.permute.xlu0 0
  %144 = vperm.xlu0 %143, %v141
  %v145 = vpop.permute.xlu0 %144
  %v147 = vmul.f32 %v145, %v140
  %v148 = vmul.f32 %v147, 1.442695
  %v149 = vpow.pop %v148
  %v150 = vadd.f32 %v149, 1.0
  %v151 = vrcp.pop %v150
  %v152 = vmul.f32 1.0, %v151
  %vm153 = vcmask 15360
  %154 = vst.msk [vmem:[%s5] sm:$0xff] %vm153, %v152
  // Predicated region
  $region22: #{tpu_custom_call.1} parent=0 // pred_check
    _
  $region23: #{tpu_custom_call.1} parent=0 // pred_check_branch
    %156 = sbr.rel (0) target = $region25
  $region24: #{tpu_custom_call.1} parent=0 // pred_region
    _
  $region25: #{tpu_custom_call.1} parent=0 // pred_fallthru
    _
  // Predicated region
  $region26: #{tpu_custom_call.1} parent=0 // pred_check
    _
  $region27: #{tpu_custom_call.1} parent=0 // pred_check_branch
    %158 = sbr.rel (0) target = $region29
  $region28: #{tpu_custom_call.1} parent=0 // pred_region
    _
  $region29: #{tpu_custom_call.1} parent=0 // pred_fallthru
    _

</llo_original>
